<compile_context>
chip_gen: v6e
topology: v6e:2x2x1
jax: 0.10.0
libtpu: 0.0.40
codegen_flags: <defaults>
</compile_context>

<pallas_src>
import functools
import math

import jax
import jax.numpy as jnp
from jax.experimental import pallas as pl
from jax.experimental.pallas import tpu as pltpu


# ----------------------------------------------------------------------------
# Kernel
# ----------------------------------------------------------------------------
def _residual_block_kernel(dilation, residual, seq_len, act_dtype,
                           x_ref, x_prev_ref, x_next_ref,
                           w_gate_ref, b_gate_ref, w_out_ref, b_out_ref,
                           *out_refs):
    """One (batch block, time tile) per grid step.

    x_ref / x_prev_ref / x_next_ref : (Bt, Tt, C)  current / prev / next time
                                      tiles of the same activation array
                                      (prev/next clamped at the boundaries).
    w_gate_ref : (3, C, 2C)  per-tap gate weights, cols = [sigmoid | tanh]
    b_gate_ref : (1, 2C)     f32 biases           [sigmoid | tanh]
    w_out_ref  : (C, nC)     1x1 weights, nC = 2C (res|skip) or C (skip only)
    b_out_ref  : (1, nC)     f32 biases
    out_refs   : (res_ref, skip_ref) if residual else (skip_ref,)
    """
    Bt, Tt, C = x_ref.shape
    d = dilation
    t = pl.program_id(1)

    x = x_ref[...]                                        # (Bt, Tt, C) bf16

    # Dilated k=3 'same' taps: tap0 = x[g-d], tap2 = x[g+d] (g = global index).
    # Halo rows come from the neighbouring time tiles; sequence boundaries are
    # zero-masked (prev/next index_maps are clamped, so boundary data is junk).
    left = x_prev_ref[:, Tt - d:, :]                      # (Bt, d, C)
    right = x_next_ref[:, :d, :]                          # (Bt, d, C)
    x_lo = jnp.concatenate([left, x[:, :Tt - d, :]], axis=1)
    x_hi = jnp.concatenate([x[:, d:, :], right], axis=1)

    row = jax.lax.broadcasted_iota(jnp.int32, (Bt, Tt, 1), 1) + t * Tt
    x_lo = jnp.where(row >= d, x_lo, jnp.zeros_like(x_lo))
    x_hi = jnp.where(row < seq_len - d, x_hi, jnp.zeros_like(x_hi))

    rows = Bt * Tt
    x2 = x.reshape(rows, C)

    # Three accumulating MXU matmuls (no (rows, 3C) concat), f32 accumulation.
    g = jnp.dot(x_lo.reshape(rows, C), w_gate_ref[0],
                preferred_element_type=jnp.float32)
    g = g + jnp.dot(x2, w_gate_ref[1], preferred_element_type=jnp.float32)
    g = g + jnp.dot(x_hi.reshape(rows, C), w_gate_ref[2],
                    preferred_element_type=jnp.float32)
    g = (g + b_gate_ref[...]).astype(act_dtype)           # bf16 EUP path

    gated = (jax.nn.sigmoid(g[:, :C]) * jnp.tanh(g[:, C:])).astype(
        w_out_ref.dtype)

    # Fused 1x1 conv(s): (rows, C) @ (C, nC) -> [res | skip] (or just skip).
    out = jnp.dot(gated, w_out_ref[...],
                  preferred_element_type=jnp.float32) + b_out_ref[...]

    skip = out[:, -C:]
    skip_ref = out_refs[-1]
    if residual:
        res = out[:, :C] + x2.astype(jnp.float32)         # residual add in f32
        out_refs[0][...] = res.reshape(Bt, Tt, C).astype(out_refs[0].dtype)
    skip_ref[...] = skip.reshape(Bt, Tt, C).astype(skip_ref.dtype)


# ----------------------------------------------------------------------------
# Block picking & VMEM budget
# ----------------------------------------------------------------------------
def _pick_time_block(T, dilation, row_target=2048):
    # divisor of T, multiple of 8 (or == T), >= dilation; prefer largest <= target
    cands = [t for t in range(1, T + 1)
             if T % t == 0 and (t == T or t % 8 == 0) and t >= dilation]
    small = [t for t in cands if t <= row_target]
    return max(small) if small else min(cands)


def _pick_batch_block(B, time_block, row_target=2048):
    cands = [b for b in range(1, B + 1)
             if B % b == 0 and b * time_block <= row_target]
    return max(cands) if cands else 1


def _vmem_limit_bytes(Bt, Tt, C, n_out, in_bytes, out_bytes):
    rows = Bt * Tt
    io = 2 * (3 * rows * C * in_bytes + n_out * rows * C * out_bytes)  # dbl-buf
    w = 2 * ((3 * C * 2 * C + C * n_out * C) * in_bytes
             + (2 * C + n_out * C) * 4)
    tmp = rows * (2 * C * in_bytes      # x_lo, x_hi
                  + 2 * C * 4           # gate f32
                  + 2 * C * in_bytes    # gate bf16 + gated
                  + n_out * C * 4       # out f32
                  + C * 4)              # residual add temp
    est = io + w + tmp
    return int(min(max(2 * est, 32 * 1024 * 1024), 100 * 1024 * 1024))


# ----------------------------------------------------------------------------
# Wrapper
# ----------------------------------------------------------------------------
def residual_block(x_ntc, params, *, dilation, residual=True,
                   batch_block=None, time_block=None,
                   compute_dtype=jnp.bfloat16,
                   act_dtype=jnp.bfloat16,      # use jnp.float32 on v5e
                   out_dtype=None):
    """x_ntc: (B, T, C).  Returns (res_out, skip_out), each (B, T, C)."""
    B, T, C = x_ntc.shape
    assert 1 <= dilation < T, "dilation must be smaller than the sequence length"
    assert C % 128 == 0, "pad channels to a multiple of 128 (lane-dense layout)"
    if out_dtype is None:
        out_dtype = compute_dtype

    if time_block is None:
        time_block = _pick_time_block(T, dilation)
    if batch_block is None:
        batch_block = _pick_batch_block(B, time_block)
    Tt, Bt = time_block, batch_block
    assert T % Tt == 0 and (Tt == T or Tt % 8 == 0)
    assert Tt >= dilation, "time_block must be >= dilation (halo is one tile)"
    assert B % Bt == 0

    w_sig, b_sig = params["sig"]       # (3, C, C), (1, C)
    w_tanh, b_tanh = params["tanh"]    # (3, C, C), (1, C)
    w_skip, b_skip = params["skip"]    # (C, C),    (1, C)

    # Gate weights: (3, C, 2C), cols = [sigmoid branch | tanh branch].
    w_gate = jnp.stack(
        [jnp.concatenate([w_sig[k], w_tanh[k]], axis=1) for k in range(3)],
        axis=0).astype(compute_dtype)
    b_gate = jnp.concatenate([b_sig, b_tanh], axis=1).astype(jnp.float32)

    if residual:
        w_res, b_res = params["res"]
        w_out = jnp.concatenate([w_res, w_skip], axis=1).astype(compute_dtype)
        b_out = jnp.concatenate([b_res, b_skip], axis=1).astype(jnp.float32)
        n_out = 2
    else:
        w_out = w_skip.astype(compute_dtype)
        b_out = b_skip.astype(jnp.float32)
        n_out = 1

    x_in = x_ntc.astype(compute_dtype)

    nb, nt = B // Bt, T // Tt
    nt_last = nt - 1

    kernel = functools.partial(_residual_block_kernel,
                               dilation, residual, T, act_dtype)

    blk = lambda b, t: (b, t, 0)
    in_specs = [
        pl.BlockSpec((Bt, Tt, C), blk),                                   # x cur
        pl.BlockSpec((Bt, Tt, C),
                     lambda b, t: (b, jnp.maximum(t - 1, 0), 0)),         # x prev
        pl.BlockSpec((Bt, Tt, C),
                     lambda b, t: (b, jnp.minimum(t + 1, nt_last), 0)),   # x next
        pl.BlockSpec((3, C, 2 * C), lambda b, t: (0, 0, 0)),              # w_gate
        pl.BlockSpec((1, 2 * C), lambda b, t: (0, 0)),                    # b_gate
        pl.BlockSpec((C, n_out * C), lambda b, t: (0, 0)),                # w_out
        pl.BlockSpec((1, n_out * C), lambda b, t: (0, 0)),                # b_out
    ]
    out_specs = [pl.BlockSpec((Bt, Tt, C), blk) for _ in range(n_out)]
    out_shape = tuple(jax.ShapeDtypeStruct((B, T, C), out_dtype)
                      for _ in range(n_out))

    vmem_limit = _vmem_limit_bytes(
        Bt, Tt, C, n_out,
        in_bytes=jnp.dtype(compute_dtype).itemsize,
        out_bytes=jnp.dtype(out_dtype).itemsize)

    outs = pl.pallas_call(
        kernel,
        out_shape=out_shape,
        grid_spec=pltpu.PrefetchScalarGridSpec(
            num_scalar_prefetch=0,
            grid=(nb, nt),
            in_specs=in_specs,
            out_specs=out_specs,
        ),
        compiler_params=pltpu.CompilerParams(
            dimension_semantics=("parallel", "arbitrary"),
            vmem_limit_bytes=vmem_limit),
    )(x_in, x_in, x_in, w_gate, b_gate, w_out, b_out)

    if residual:
        res_out, skip_out = outs
    else:
        (skip_out,) = outs
        res_out = skip_out
    return res_out, skip_out


# ----------------------------------------------------------------------------
# Deterministic parameter construction (mirrors the PyTorch __init__ shapes:
# Conv1d(C, C, 3).weight -> (C_out, C_in, 3); Conv1d(C, C, 1) -> (C_out, C_in, 1)).
# Stored as (K, Cin, Cout) for k=3 and (Cin, Cout) for 1x1; bias = 0.
# ----------------------------------------------------------------------------
def _xavier_uniform(key, c_out, c_in, ksize, gain):
    fan_in = c_in * ksize
    fan_out = c_out * ksize
    bound = gain * math.sqrt(6.0 / (fan_in + fan_out))
    w = jax.random.uniform(key, (c_out, c_in, ksize),
                           minval=-bound, maxval=bound, dtype=jnp.float32)
    return jnp.transpose(w, (2, 1, 0))


def _kaiming_uniform(key, c_out, c_in, ksize, a):
    fan_in = c_in * ksize
    gain = math.sqrt(2.0 / (1.0 + a * a))
    bound = gain * math.sqrt(3.0 / fan_in)
    w = jax.random.uniform(key, (c_out, c_in, ksize),
                           minval=-bound, maxval=bound, dtype=jnp.float32)
    return jnp.transpose(w, (2, 1, 0))


def make_params(key, channel):
    k1, k2, k3, k4 = jax.random.split(key, 4)
    zero_b = jnp.zeros((1, channel), jnp.float32)
    w_sig = _xavier_uniform(k1, channel, channel, 3, 1.0)            # sigmoid gain
    w_tanh = _xavier_uniform(k2, channel, channel, 3, 5.0 / 3.0)     # tanh gain
    w_skip = _kaiming_uniform(k3, channel, channel, 1, 0.1)[0]       # (C, C)
    w_res = _xavier_uniform(k4, channel, channel, 1, 1.0)[0]         # (C, C)
    return {
        "sig": (w_sig, zero_b),
        "tanh": (w_tanh, zero_b),
        "skip": (w_skip, zero_b),
        "res": (w_res, zero_b),
    }


# Pure-JAX reference (same bf16 rounding of operands / activations).
def _reference(x, params, dilation, residual, compute_dtype, act_dtype):
    rnd = lambda a: a.astype(compute_dtype).astype(jnp.float32)
    w_sig, b_sig = params["sig"]
    w_tanh, b_tanh = params["tanh"]
    w_skip, b_skip = params["skip"]
    w_res, b_res = params["res"]
    B, T, C = x.shape
    d = dilation
    x32 = rnd(x)
    xpad = jnp.pad(x32, ((0, 0), (d, d), (0, 0)))

    def conv3(w, b):
        acc = jnp.zeros((B, T, C), jnp.float32)
        for k in range(3):
            acc += jnp.einsum('btc,cd->btd', xpad[:, k * d:k * d + T, :], rnd(w[k]))
        return (acc + b).astype(act_dtype).astype(jnp.float32)

    gated = jax.nn.sigmoid(conv3(w_sig, b_sig)) * jnp.tanh(conv3(w_tanh, b_tanh))
    gated = rnd(gated)
    skip = jnp.einsum('btc,cd->btd', gated, rnd(w_skip)) + b_skip
    if residual:
        res = jnp.einsum('btc,cd->btd', gated, rnd(w_res)) + b_res + x32
    else:
        res = skip
    return res, skip


if __name__ == "__main__":
    # Small test shapes: module default channel=128; T chosen so the explicit
    # time tiling (Tt=16) exercises first / middle / last halo tiles.
    B, T, C = 2, 48, 128
    dilation = 3

    key = jax.random.PRNGKey(0)
    kx, kp = jax.random.split(key)
    x = jax.random.normal(kx, (B, T, C), dtype=jnp.float32)   # NTC layout
    params = make_params(kp, C)

    # Residual path, explicit small tiles (3 time tiles per batch block).
    res_out, skip_out = residual_block(x, params, dilation=dilation,
                                       residual=True,
                                       batch_block=1, time_block=16)
    jax.block_until_ready((res_out, skip_out))
    assert res_out.shape == (B, T, C) and skip_out.shape == (B, T, C)
    assert res_out.dtype == jnp.bfloat16 and skip_out.dtype == jnp.bfloat16

    res_ref, skip_ref = _reference(x, params, dilation, True,
                                   jnp.bfloat16, jnp.bfloat16)
    assert jnp.allclose(res_out.astype(jnp.float32), res_ref,
                        atol=3e-2, rtol=3e-2)
    assert jnp.allclose(skip_out.astype(jnp.float32), skip_ref,
                        atol=3e-2, rtol=3e-2)

    # Skip-only path (single output, (C, C) 1x1 matmul), auto-picked blocks.
    res2, skip2 = residual_block(x, params, dilation=dilation, residual=False)
    jax.block_until_ready((res2, skip2))
    _, skip_ref2 = _reference(x, params, dilation, False,
                              jnp.bfloat16, jnp.bfloat16)
    assert jnp.allclose(skip2.astype(jnp.float32), skip_ref2,
                        atol=3e-2, rtol=3e-2)
    assert jnp.array_equal(res2, skip2)

    print("KERNEL_OK")
</pallas_src>

<mosaic_0001>
module attributes {stable_mosaic.version = 11 : i64} {
  func.func @_residual_block_kernel(%arg0: i32, %arg1: i32, %arg2: memref<1x16x128xbf16, #tpu.memory_space<vmem>>, %arg3: memref<1x16x128xbf16, #tpu.memory_space<vmem>>, %arg4: memref<1x16x128xbf16, #tpu.memory_space<vmem>>, %arg5: memref<3x128x256xbf16, #tpu.memory_space<vmem>>, %arg6: memref<1x256xf32, #tpu.memory_space<vmem>>, %arg7: memref<128x256xbf16, #tpu.memory_space<vmem>>, %arg8: memref<1x256xf32, #tpu.memory_space<vmem>>, %arg9: memref<1x16x128xbf16, #tpu.memory_space<vmem>>, %arg10: memref<1x16x128xbf16, #tpu.memory_space<vmem>>) attributes {dimension_semantics = [#tpu.dimension_semantics<parallel>, #tpu.dimension_semantics<arbitrary>], iteration_bounds = array<i64: 2, 3>, scalar_prefetch = 0 : i64, scratch_operands = 0 : i64, tpu.core_type = #tpu.core_type<tc>, window_params = [{transform_indices = @transform_0, window_bounds = array<i64: 1, 16, 128>}, {transform_indices = @transform_1, window_bounds = array<i64: 1, 16, 128>}, {transform_indices = @transform_2, window_bounds = array<i64: 1, 16, 128>}, {pipeline_mode = #tpu.pipeline_mode<synchronous>, transform_indices = @transform_3, window_bounds = array<i64: 3, 128, 256>}, {pipeline_mode = #tpu.pipeline_mode<synchronous>, transform_indices = @transform_4, window_bounds = array<i64: 1, 256>}, {pipeline_mode = #tpu.pipeline_mode<synchronous>, transform_indices = @transform_5, window_bounds = array<i64: 128, 256>}, {pipeline_mode = #tpu.pipeline_mode<synchronous>, transform_indices = @transform_6, window_bounds = array<i64: 1, 256>}, {transform_indices = @transform_7, window_bounds = array<i64: 1, 16, 128>}, {transform_indices = @transform_8, window_bounds = array<i64: 1, 16, 128>}]} {
    %c0 = arith.constant 0 : index
    %c0_0 = arith.constant 0 : index
    %c0_1 = arith.constant 0 : index
    %0 = vector.load %arg2[%c0, %c0_0, %c0_1] : memref<1x16x128xbf16, #tpu.memory_space<vmem>>, vector<1x16x128xbf16>
    %c0_2 = arith.constant 0 : index
    %c13 = arith.constant 13 : index
    %c0_3 = arith.constant 0 : index
    %1 = vector.load %arg3[%c0_2, %c13, %c0_3] : memref<1x16x128xbf16, #tpu.memory_space<vmem>>, vector<1x3x128xbf16>
    %c0_4 = arith.constant 0 : index
    %c0_5 = arith.constant 0 : index
    %c0_6 = arith.constant 0 : index
    %2 = vector.load %arg4[%c0_4, %c0_5, %c0_6] : memref<1x16x128xbf16, #tpu.memory_space<vmem>>, vector<1x3x128xbf16>
    %3 = vector.extract_strided_slice %0 {offsets = [0, 0, 0], sizes = [1, 13, 128], strides = [1, 1, 1]} : vector<1x16x128xbf16> to vector<1x13x128xbf16>
    %4 = tpu.concatenate %1, %3 in 1 : vector<1x3x128xbf16>, vector<1x13x128xbf16> -> vector<1x16x128xbf16>
    %5 = vector.extract_strided_slice %0 {offsets = [0, 3, 0], sizes = [1, 13, 128], strides = [1, 1, 1]} : vector<1x16x128xbf16> to vector<1x13x128xbf16>
    %6 = tpu.concatenate %5, %2 in 1 : vector<1x13x128xbf16>, vector<1x3x128xbf16> -> vector<1x16x128xbf16>
    %7 = tpu.iota {dimensions = array<i32: 1>} : vector<1x16x1xi32>
    %c16_i32 = arith.constant 16 : i32
    %8 = arith.muli %arg1, %c16_i32 : i32
    %9 = vector.broadcast %8 : i32 to vector<1x16x1xi32>
    %10 = arith.addi %7, %9 : vector<1x16x1xi32>
    %c3_i32 = arith.constant 3 : i32
    %11 = vector.broadcast %c3_i32 : i32 to vector<1x16x1xi32>
    %12 = arith.cmpi sge, %10, %11 : vector<1x16x1xi32>
    %cst = arith.constant 0.000000e+00 : bf16
    %13 = vector.broadcast %cst : bf16 to vector<1x16x128xbf16>
    %14 = vector.shape_cast %12 : vector<1x16x1xi1> to vector<1x16x1xi1>
    %15 = vector.broadcast %14 : vector<1x16x1xi1> to vector<1x16x128xi1>
    %16 = arith.select %15, %4, %13 : vector<1x16x128xi1>, vector<1x16x128xbf16>
    %c45_i32 = arith.constant 45 : i32
    %17 = vector.broadcast %c45_i32 : i32 to vector<1x16x1xi32>
    %18 = arith.cmpi slt, %10, %17 : vector<1x16x1xi32>
    %cst_7 = arith.constant 0.000000e+00 : bf16
    %19 = vector.broadcast %cst_7 : bf16 to vector<1x16x128xbf16>
    %20 = vector.shape_cast %18 : vector<1x16x1xi1> to vector<1x16x1xi1>
    %21 = vector.broadcast %20 : vector<1x16x1xi1> to vector<1x16x128xi1>
    %22 = arith.select %21, %6, %19 : vector<1x16x128xi1>, vector<1x16x128xbf16>
    %23 = vector.shape_cast %0 : vector<1x16x128xbf16> to vector<16x128xbf16>
    %24 = vector.shape_cast %16 : vector<1x16x128xbf16> to vector<16x128xbf16>
    %c0_8 = arith.constant 0 : index
    %c0_9 = arith.constant 0 : index
    %c0_10 = arith.constant 0 : index
    %25 = vector.load %arg5[%c0_8, %c0_9, %c0_10] : memref<3x128x256xbf16, #tpu.memory_space<vmem>>, vector<1x128x256xbf16>
    %26 = vector.shape_cast %25 : vector<1x128x256xbf16> to vector<128x256xbf16>
    %cst_11 = arith.constant dense<0.000000e+00> : vector<16x256xf32>
    %27 = tpu.matmul %24, %26, %cst_11 {dimension_numbers = #tpu.dot_dimension_numbers<[1], [0], [0], [1], [0, 0, 1, 1], [], []>} : vector<16x128xbf16>, vector<128x256xbf16>, vector<16x256xf32> -> vector<16x256xf32>
    %c1 = arith.constant 1 : index
    %c0_12 = arith.constant 0 : index
    %c0_13 = arith.constant 0 : index
    %28 = vector.load %arg5[%c1, %c0_12, %c0_13] : memref<3x128x256xbf16, #tpu.memory_space<vmem>>, vector<1x128x256xbf16>
    %29 = vector.shape_cast %28 : vector<1x128x256xbf16> to vector<128x256xbf16>
    %cst_14 = arith.constant dense<0.000000e+00> : vector<16x256xf32>
    %30 = tpu.matmul %23, %29, %cst_14 {dimension_numbers = #tpu.dot_dimension_numbers<[1], [0], [0], [1], [0, 0, 1, 1], [], []>} : vector<16x128xbf16>, vector<128x256xbf16>, vector<16x256xf32> -> vector<16x256xf32>
    %31 = arith.addf %27, %30 : vector<16x256xf32>
    %32 = vector.shape_cast %22 : vector<1x16x128xbf16> to vector<16x128xbf16>
    %c2 = arith.constant 2 : index
    %c0_15 = arith.constant 0 : index
    %c0_16 = arith.constant 0 : index
    %33 = vector.load %arg5[%c2, %c0_15, %c0_16] : memref<3x128x256xbf16, #tpu.memory_space<vmem>>, vector<1x128x256xbf16>
    %34 = vector.shape_cast %33 : vector<1x128x256xbf16> to vector<128x256xbf16>
    %cst_17 = arith.constant dense<0.000000e+00> : vector<16x256xf32>
    %35 = tpu.matmul %32, %34, %cst_17 {dimension_numbers = #tpu.dot_dimension_numbers<[1], [0], [0], [1], [0, 0, 1, 1], [], []>} : vector<16x128xbf16>, vector<128x256xbf16>, vector<16x256xf32> -> vector<16x256xf32>
    %36 = arith.addf %31, %35 : vector<16x256xf32>
    %c0_18 = arith.constant 0 : index
    %c0_19 = arith.constant 0 : index
    %37 = vector.load %arg6[%c0_18, %c0_19] : memref<1x256xf32, #tpu.memory_space<vmem>>, vector<1x256xf32>
    %38 = vector.broadcast %37 : vector<1x256xf32> to vector<16x256xf32>
    %39 = arith.addf %36, %38 : vector<16x256xf32>
    %40 = arith.truncf %39 : vector<16x256xf32> to vector<16x256xbf16>
    %41 = vector.extract_strided_slice %40 {offsets = [0, 0], sizes = [16, 128], strides = [1, 1]} : vector<16x256xbf16> to vector<16x128xbf16>
    %42 = arith.negf %41 : vector<16x128xbf16>
    %43 = math.exp %42 : vector<16x128xbf16>
    %cst_20 = arith.constant 1.000000e+00 : bf16
    %44 = vector.broadcast %cst_20 : bf16 to vector<16x128xbf16>
    %45 = arith.addf %44, %43 : vector<16x128xbf16>
    %46 = arith.divf %44, %45 : vector<16x128xbf16>
    %47 = vector.extract_strided_slice %40 {offsets = [0, 128], sizes = [16, 128], strides = [1, 1]} : vector<16x256xbf16> to vector<16x128xbf16>
    %48 = math.tanh %47 : vector<16x128xbf16>
    %49 = arith.mulf %46, %48 : vector<16x128xbf16>
    %c0_21 = arith.constant 0 : index
    %c0_22 = arith.constant 0 : index
    %50 = vector.load %arg7[%c0_21, %c0_22] : memref<128x256xbf16, #tpu.memory_space<vmem>>, vector<128x256xbf16>
    %cst_23 = arith.constant dense<0.000000e+00> : vector<16x256xf32>
    %51 = tpu.matmul %49, %50, %cst_23 {dimension_numbers = #tpu.dot_dimension_numbers<[1], [0], [0], [1], [0, 0, 1, 1], [], []>} : vector<16x128xbf16>, vector<128x256xbf16>, vector<16x256xf32> -> vector<16x256xf32>
    %c0_24 = arith.constant 0 : index
    %c0_25 = arith.constant 0 : index
    %52 = vector.load %arg8[%c0_24, %c0_25] : memref<1x256xf32, #tpu.memory_space<vmem>>, vector<1x256xf32>
    %53 = vector.broadcast %52 : vector<1x256xf32> to vector<16x256xf32>
    %54 = arith.addf %51, %53 : vector<16x256xf32>
    %55 = vector.extract_strided_slice %54 {offsets = [0, 128], sizes = [16, 128], strides = [1, 1]} : vector<16x256xf32> to vector<16x128xf32>
    %56 = vector.extract_strided_slice %54 {offsets = [0, 0], sizes = [16, 128], strides = [1, 1]} : vector<16x256xf32> to vector<16x128xf32>
    %57 = arith.extf %23 : vector<16x128xbf16> to vector<16x128xf32>
    %58 = arith.addf %56, %57 : vector<16x128xf32>
    %59 = vector.shape_cast %58 : vector<16x128xf32> to vector<1x16x128xf32>
    %60 = arith.truncf %59 : vector<1x16x128xf32> to vector<1x16x128xbf16>
    %c0_26 = arith.constant 0 : index
    %c0_27 = arith.constant 0 : index
    %c0_28 = arith.constant 0 : index
    %61 = vector.load %arg9[%c0_26, %c0_27, %c0_28] : memref<1x16x128xbf16, #tpu.memory_space<vmem>>, vector<1x16x128xbf16>
    tpu.vector_store %arg9[%c0_26, %c0_27, %c0_28], %60 {strides = array<i32>} : memref<1x16x128xbf16, #tpu.memory_space<vmem>>, vector<1x16x128xbf16>,
    %62 = vector.shape_cast %55 : vector<16x128xf32> to vector<1x16x128xf32>
    %63 = arith.truncf %62 : vector<1x16x128xf32> to vector<1x16x128xbf16>
    %c0_29 = arith.constant 0 : index
    %c0_30 = arith.constant 0 : index
    %c0_31 = arith.constant 0 : index
    %64 = vector.load %arg10[%c0_29, %c0_30, %c0_31] : memref<1x16x128xbf16, #tpu.memory_space<vmem>>, vector<1x16x128xbf16>
    tpu.vector_store %arg10[%c0_29, %c0_30, %c0_31], %63 {strides = array<i32>} : memref<1x16x128xbf16, #tpu.memory_space<vmem>>, vector<1x16x128xbf16>,
    return
  }
  func.func @transform_0(%arg0: i32, %arg1: i32) -> (i32, i32, i32) {
    %c0_i32 = arith.constant 0 : i32
    %c0_i32_0 = arith.constant 0 : i32
    return %arg0, %arg1, %c0_i32 : i32, i32, i32
  }
  func.func @transform_1(%arg0: i32, %arg1: i32) -> (i32, i32, i32) {
    %c1_i32 = arith.constant 1 : i32
    %0 = arith.subi %arg1, %c1_i32 : i32
    %c0_i32 = arith.constant 0 : i32
    %1 = arith.maxsi %0, %c0_i32 : i32
    %c0_i32_0 = arith.constant 0 : i32
    %c0_i32_1 = arith.constant 0 : i32
    return %arg0, %1, %c0_i32_0 : i32, i32, i32
  }
  func.func @transform_2(%arg0: i32, %arg1: i32) -> (i32, i32, i32) {
    %c1_i32 = arith.constant 1 : i32
    %0 = arith.addi %arg1, %c1_i32 : i32
    %c2_i32 = arith.constant 2 : i32
    %1 = arith.minsi %0, %c2_i32 : i32
    %c0_i32 = arith.constant 0 : i32
    %c0_i32_0 = arith.constant 0 : i32
    return %arg0, %1, %c0_i32 : i32, i32, i32
  }
  func.func @transform_3(%arg0: i32, %arg1: i32) -> (i32, i32, i32) {
    %c0_i32 = arith.constant 0 : i32
    %c0_i32_0 = arith.constant 0 : i32
    %c0_i32_1 = arith.constant 0 : i32
    %c0_i32_2 = arith.constant 0 : i32
    return %c0_i32, %c0_i32_0, %c0_i32_1 : i32, i32, i32
  }
  func.func @transform_4(%arg0: i32, %arg1: i32) -> (i32, i32) {
    %c0_i32 = arith.constant 0 : i32
    %c0_i32_0 = arith.constant 0 : i32
    %c0_i32_1 = arith.constant 0 : i32
    return %c0_i32, %c0_i32_0 : i32, i32
  }
  func.func @transform_5(%arg0: i32, %arg1: i32) -> (i32, i32) {
    %c0_i32 = arith.constant 0 : i32
    %c0_i32_0 = arith.constant 0 : i32
    %c0_i32_1 = arith.constant 0 : i32
    return %c0_i32, %c0_i32_0 : i32, i32
  }
  func.func @transform_6(%arg0: i32, %arg1: i32) -> (i32, i32) {
    %c0_i32 = arith.constant 0 : i32
    %c0_i32_0 = arith.constant 0 : i32
    %c0_i32_1 = arith.constant 0 : i32
    return %c0_i32, %c0_i32_0 : i32, i32
  }
  func.func @transform_7(%arg0: i32, %arg1: i32) -> (i32, i32, i32) {
    %c0_i32 = arith.constant 0 : i32
    %c0_i32_0 = arith.constant 0 : i32
    return %arg0, %arg1, %c0_i32 : i32, i32, i32
  }
  func.func @transform_8(%arg0: i32, %arg1: i32) -> (i32, i32, i32) {
    %c0_i32 = arith.constant 0 : i32
    %c0_i32_0 = arith.constant 0 : i32
    return %arg0, %arg1, %c0_i32 : i32, i32, i32
  }
}

</mosaic_0001>

<llo_original>
// kernel: tpu_custom_call.1
$region0: #{tpu_custom_call.1}
  #allocation0 [shape = 'u32[]', space=smem, size = 0x4, offset = 0x4, fixed_abs, tag = 'smem constant byte address 0x4 - core index']
  #allocation1 [shape = 'u32[144,128]{1,0:T(1,128)}', space=vmem, size = 0x12000, scoped, tag = 'internal scratch']
  %s0 = inlined_call_operand.hbm [shape: bf16[2,48,128], index: 0, kind: input, shape index: {}]
  %s1 = inlined_call_operand.hbm [shape: bf16[2,48,128], index: 1, kind: input, shape index: {}]
  %s2 = inlined_call_operand.hbm [shape: bf16[2,48,128], index: 2, kind: input, shape index: {}]
  %s3 = inlined_call_operand.hbm [shape: bf16[3,128,256], index: 3, kind: input, shape index: {}]
  %s4 = inlined_call_operand.vmem [shape: f32[1,256], index: 4, kind: input, shape index: {}]
  %s5 = inlined_call_operand.hbm [shape: bf16[128,256], index: 5, kind: input, shape index: {}]
  %s6 = inlined_call_operand.vmem [shape: f32[1,256], index: 6, kind: input, shape index: {}]
  %s7 = inlined_call_operand.hbm [shape: bf16[2,48,128], index: 7, kind: output, shape index: {0}]
  %s8 = inlined_call_operand.hbm [shape: bf16[2,48,128], index: 8, kind: output, shape index: {1}]
  %9 = xla_tuple %s7, %s8
  %s10 = sld [smem:[#allocation0]]
  $region89: #{tpu_custom_call.1} parent=0
    _
  %s12 = ssub.s32 1, %s10
  %s13 = scalar_select 0, %s12, %s10
  $region1: #{tpu_custom_call.1} parent=0
    #allocation2 [shape = 'u8[8192]{0}', space=vmem, size = 0x2000, scoped, tag = 'input window, operand 0']
    #allocation3 [shape = 's32[2]{0}', space=sflag, size = 0x8, scoped, tag = 'scoped memory for tpu_custom_call.1']
    #allocation4 [shape = 's32[2]{0}', space=sflag, size = 0x8, scoped, tag = 'scoped memory for tpu_custom_call.1']
    #allocation5 [shape = 'u8[8192]{0}', space=vmem, size = 0x2000, scoped, tag = 'input window, operand 1']
    #allocation6 [shape = 's32[2]{0}', space=sflag, size = 0x8, scoped, tag = 'scoped memory for tpu_custom_call.1']
    #allocation7 [shape = 'u8[8192]{0}', space=vmem, size = 0x2000, scoped, tag = 'input window, operand 2']
    #allocation8 [shape = 'u8[196608]{0}', space=vmem, size = 0x30000, scoped, tag = 'input window, operand 3, single buffered']
    #allocation9 [shape = 's32[1]{0}', space=sflag, size = 0x4, scoped, tag = 'scoped memory for tpu_custom_call.1']
    #allocation10 [shape = 'u8[65536]{0}', space=vmem, size = 0x10000, scoped, tag = 'input window, operand 5, single buffered']
    #allocation11 [shape = 'u8[8192]{0}', space=vmem, size = 0x2000, scoped, tag = 'output window, operand 0']
    #allocation12 [shape = 'u8[8192]{0}', space=vmem, size = 0x2000, scoped, tag = 'output window, operand 1']
    #allocation13 [shape = 's32[2]{0}', space=sflag, size = 0x8, scoped, tag = 'scoped memory for tpu_custom_call.1']
    %14 = vsyncpa [#allocation3], 0
    %s15 = scalar_lea.sflag [#allocation3], 1
    %16 = vsyncpa %s15, 0
    %17 = vsyncpa [#allocation6], 0
    %s18 = scalar_lea.sflag [#allocation6], 1
    %19 = vsyncpa %s18, 0
    %20 = vsyncpa [#allocation9], 0
    %21 = vsyncpa [#allocation4], 0
    %s22 = scalar_lea.sflag [#allocation4], 1
    %23 = vsyncpa %s22, 0
    %24 = vsyncpa [#allocation13], 0
    %s25 = scalar_lea.sflag [#allocation13], 1
    %26 = vsyncpa %s25, 0
    loop: start=0, step=1, limit=8
    $region2: #{tpu_custom_call.1} parent=1 // loop_pre_header
      _
    $region3: #{tpu_custom_call.1} parent=1 // loop_header
      %s28 = sphi 0, %s32
      %p29 = scmp.ge.s32.totalorder %s28, 8
      %s35 = sphi 0, %s47
      %s36 = sphi 0, %s43
      %s37 = sphi 0, %s35
      %s38 = sphi 0, %s36
      %s39 = sphi 0, %s37
      %s40 = sphi 0, %s38
      %s52 = sphi 0, %s54
      %s55 = sphi 0, %s52
      %s56 = sphi 0, %s55
      %s72 = sphi 0, %s56
      %s86 = sphi 0, %s88
      %s89 = sphi 0, %s86
      %s90 = sphi 0, %s89
      %s106 = sphi 0, %s90
      %s120 = sphi 0, %s122
      %s123 = sphi 0, %s120
      %s124 = sphi 0, %s123
      %s140 = sphi 0, %s124
      %s144 = sphi 0, %s144
      %s146 = sphi 0, %s144
      %s147 = sphi 0, %s146
      %s161 = sphi 0, %s147
      %s165 = sphi 0, %s165
      %s167 = sphi 0, %s165
      %s168 = sphi 0, %s167
      %s182 = sphi 0, %s168
      %s186 = sphi 0, %s186
      %s188 = sphi 0, %s186
      %s189 = sphi 0, %s188
      %s203 = sphi 0, %s189
      %s207 = sphi 0, %s207
      %s209 = sphi 0, %s207
      %s210 = sphi 0, %s209
      %s224 = sphi 0, %s210
      %s232 = sphi 0, %s234
      %s235 = sphi 0, %s232
      %s236 = sphi 0, %s235
      %s252 = sphi 0, %s236
      %s260 = sphi 0, %s262
      %s263 = sphi 0, %s260
      %s264 = sphi 0, %s263
      %s280 = sphi 0, %s264
    $region4: #{tpu_custom_call.1} parent=1 // loop_header_branch
      %31 = sbr.rel (%p29) target = $region8
    $region5: #{tpu_custom_call.1} parent=1 // loop_body
      %s33 = ssub.s32 %s28, 1
      %s34 = ssub.s32 %s28, 2
      %s41 = sadd.s32 1, %s36
      %p42 = scmp.ge.s32.totalorder %s41, 3
      %s43 = scalar_select %p42, 0, %s41
      %s44 = sadd.s32 1, %s35
      %s45 = scalar_select %p42, %s44, %s35
      %p46 = scmp.ge.s32.totalorder %s45, 2
      %s47 = scalar_select %p46, 0, %s45
      %s48 = ssub.s32 %s35, %s47
      %s49 = ssub.s32 %s36, %s43
      %s50 = sor.u32 %s48, %s49
      %p51 = scmp.eq.s32.totalorder %s50, 0
      %s53 = sadd.s32 %s52, 1
      %s54 = scalar_select %p51, %s52, %s53
      %p57 = pneg %p51
      %p58 = scmp.eq.s32.totalorder %s28, 5
      %p59 = por %p57, %p58
      %p60 = scmp.ne.s32.totalorder %s52, %s55
      %p61 = scmp.eq.s32.totalorder %s28, 0
      %p62 = por %p60, %p61
      %p63 = scmp.ne.s32.totalorder %s52, %s55
      %p64 = scmp.eq.s32.totalorder %s33, 5
      %p65 = por %p63, %p64
      %p66 = scmp.ne.s32.totalorder %s55, %s56
      %p67 = scmp.eq.s32.totalorder %s33, 0
      %p68 = por %p66, %p67
      %p69 = scmp.ne.s32.totalorder %s55, %s56
      %p70 = scmp.eq.s32.totalorder %s34, 5
      %p71 = por %p69, %p70
      %p73 = scmp.ne.s32.totalorder %s56, %s72
      %p74 = scmp.eq.s32.totalorder %s34, 0
      %p75 = por %p73, %p74
      %s76 = ssub.s32 %s36, 1
      %p77 = scmp.gt.s32.totalorder %s76, 0
      %s78 = scalar_select %p77, %s76, 0
      %s79 = ssub.s32 %s43, 1
      %p80 = scmp.gt.s32.totalorder %s79, 0
      %s81 = scalar_select %p80, %s79, 0
      %s82 = ssub.s32 %s35, %s47
      %s83 = ssub.s32 %s78, %s81
      %s84 = sor.u32 %s82, %s83
      %p85 = scmp.eq.s32.totalorder %s84, 0
      %s87 = sadd.s32 %s86, 1
      %s88 = scalar_select %p85, %s86, %s87
      %p91 = pneg %p85
      %p92 = scmp.eq.s32.totalorder %s28, 5
      %p93 = por %p91, %p92
      %p94 = scmp.ne.s32.totalorder %s86, %s89
      %p95 = scmp.eq.s32.totalorder %s28, 0
      %p96 = por %p94, %p95
      %p97 = scmp.ne.s32.totalorder %s86, %s89
      %p98 = scmp.eq.s32.totalorder %s33, 5
      %p99 = por %p97, %p98
      %p100 = scmp.ne.s32.totalorder %s89, %s90
      %p101 = scmp.eq.s32.totalorder %s33, 0
      %p102 = por %p100, %p101
      %p103 = scmp.ne.s32.totalorder %s89, %s90
      %p104 = scmp.eq.s32.totalorder %s34, 5
      %p105 = por %p103, %p104
      %p107 = scmp.ne.s32.totalorder %s90, %s106
      %p108 = scmp.eq.s32.totalorder %s34, 0
      %p109 = por %p107, %p108
      %s110 = sadd.s32 %s36, 1
      %p111 = scmp.lt.s32.totalorder %s110, 2
      %s112 = scalar_select %p111, %s110, 2
      %s113 = sadd.s32 %s43, 1
      %p114 = scmp.lt.s32.totalorder %s113, 2
      %s115 = scalar_select %p114, %s113, 2
      %s116 = ssub.s32 %s35, %s47
      %s117 = ssub.s32 %s112, %s115
      %s118 = sor.u32 %s116, %s117
      %p119 = scmp.eq.s32.totalorder %s118, 0
      %s121 = sadd.s32 %s120, 1
      %s122 = scalar_select %p119, %s120, %s121
      %p125 = pneg %p119
      %p126 = scmp.eq.s32.totalorder %s28, 5
      %p127 = por %p125, %p126
      %p128 = scmp.ne.s32.totalorder %s120, %s123
      %p129 = scmp.eq.s32.totalorder %s28, 0
      %p130 = por %p128, %p129
      %p131 = scmp.ne.s32.totalorder %s120, %s123
      %p132 = scmp.eq.s32.totalorder %s33, 5
      %p133 = por %p131, %p132
      %p134 = scmp.ne.s32.totalorder %s123, %s124
      %p135 = scmp.eq.s32.totalorder %s33, 0
      %p136 = por %p134, %p135
      %p137 = scmp.ne.s32.totalorder %s123, %s124
      %p138 = scmp.eq.s32.totalorder %s34, 5
      %p139 = por %p137, %p138
      %p141 = scmp.ne.s32.totalorder %s124, %s140
      %p142 = scmp.eq.s32.totalorder %s34, 0
      %p143 = por %p141, %p142
      %s145 = sadd.s32 %s144, 1
      %p148 = scmp.eq.s32.totalorder %s28, 5
      %p149 = scmp.ne.s32.totalorder %s144, %s146
      %p150 = scmp.eq.s32.totalorder %s28, 0
      %p151 = por %p149, %p150
      %p152 = scmp.ne.s32.totalorder %s144, %s146
      %p153 = scmp.eq.s32.totalorder %s33, 5
      %p154 = por %p152, %p153
      %p155 = scmp.ne.s32.totalorder %s146, %s147
      %p156 = scmp.eq.s32.totalorder %s33, 0
      %p157 = por %p155, %p156
      %p158 = scmp.ne.s32.totalorder %s146, %s147
      %p159 = scmp.eq.s32.totalorder %s34, 5
      %p160 = por %p158, %p159
      %p162 = scmp.ne.s32.totalorder %s147, %s161
      %p163 = scmp.eq.s32.totalorder %s34, 0
      %p164 = por %p162, %p163
      %s166 = sadd.s32 %s165, 1
      %p169 = scmp.eq.s32.totalorder %s28, 5
      %p170 = scmp.ne.s32.totalorder %s165, %s167
      %p171 = scmp.eq.s32.totalorder %s28, 0
      %p172 = por %p170, %p171
      %p173 = scmp.ne.s32.totalorder %s165, %s167
      %p174 = scmp.eq.s32.totalorder %s33, 5
      %p175 = por %p173, %p174
      %p176 = scmp.ne.s32.totalorder %s167, %s168
      %p177 = scmp.eq.s32.totalorder %s33, 0
      %p178 = por %p176, %p177
      %p179 = scmp.ne.s32.totalorder %s167, %s168
      %p180 = scmp.eq.s32.totalorder %s34, 5
      %p181 = por %p179, %p180
      %p183 = scmp.ne.s32.totalorder %s168, %s182
      %p184 = scmp.eq.s32.totalorder %s34, 0
      %p185 = por %p183, %p184
      %s187 = sadd.s32 %s186, 1
      %p190 = scmp.eq.s32.totalorder %s28, 5
      %p191 = scmp.ne.s32.totalorder %s186, %s188
      %p192 = scmp.eq.s32.totalorder %s28, 0
      %p193 = por %p191, %p192
      %p194 = scmp.ne.s32.totalorder %s186, %s188
      %p195 = scmp.eq.s32.totalorder %s33, 5
      %p196 = por %p194, %p195
      %p197 = scmp.ne.s32.totalorder %s188, %s189
      %p198 = scmp.eq.s32.totalorder %s33, 0
      %p199 = por %p197, %p198
      %p200 = scmp.ne.s32.totalorder %s188, %s189
      %p201 = scmp.eq.s32.totalorder %s34, 5
      %p202 = por %p200, %p201
      %p204 = scmp.ne.s32.totalorder %s189, %s203
      %p205 = scmp.eq.s32.totalorder %s34, 0
      %p206 = por %p204, %p205
      %s208 = sadd.s32 %s207, 1
      %p211 = scmp.eq.s32.totalorder %s28, 5
      %p212 = scmp.ne.s32.totalorder %s207, %s209
      %p213 = scmp.eq.s32.totalorder %s28, 0
      %p214 = por %p212, %p213
      %p215 = scmp.ne.s32.totalorder %s207, %s209
      %p216 = scmp.eq.s32.totalorder %s33, 5
      %p217 = por %p215, %p216
      %p218 = scmp.ne.s32.totalorder %s209, %s210
      %p219 = scmp.eq.s32.totalorder %s33, 0
      %p220 = por %p218, %p219
      %p221 = scmp.ne.s32.totalorder %s209, %s210
      %p222 = scmp.eq.s32.totalorder %s34, 5
      %p223 = por %p221, %p222
      %p225 = scmp.ne.s32.totalorder %s210, %s224
      %p226 = scmp.eq.s32.totalorder %s34, 0
      %p227 = por %p225, %p226
      %s228 = ssub.s32 %s35, %s47
      %s229 = ssub.s32 %s36, %s43
      %s230 = sor.u32 %s228, %s229
      %p231 = scmp.eq.s32.totalorder %s230, 0
      %s233 = sadd.s32 %s232, 1
      %s234 = scalar_select %p231, %s232, %s233
      %p237 = pneg %p231
      %p238 = scmp.eq.s32.totalorder %s28, 5
      %p239 = por %p237, %p238
      %p240 = scmp.ne.s32.totalorder %s232, %s235
      %p241 = scmp.eq.s32.totalorder %s28, 0
      %p242 = por %p240, %p241
      %p243 = scmp.ne.s32.totalorder %s232, %s235
      %p244 = scmp.eq.s32.totalorder %s33, 5
      %p245 = por %p243, %p244
      %p246 = scmp.ne.s32.totalorder %s235, %s236
      %p247 = scmp.eq.s32.totalorder %s33, 0
      %p248 = por %p246, %p247
      %p249 = scmp.ne.s32.totalorder %s235, %s236
      %p250 = scmp.eq.s32.totalorder %s34, 5
      %p251 = por %p249, %p250
      %p253 = scmp.ne.s32.totalorder %s236, %s252
      %p254 = scmp.eq.s32.totalorder %s34, 0
      %p255 = por %p253, %p254
      %s256 = ssub.s32 %s35, %s47
      %s257 = ssub.s32 %s36, %s43
      %s258 = sor.u32 %s256, %s257
      %p259 = scmp.eq.s32.totalorder %s258, 0
      %s261 = sadd.s32 %s260, 1
      %s262 = scalar_select %p259, %s260, %s261
      %p265 = pneg %p259
      %p266 = scmp.eq.s32.totalorder %s28, 5
      %p267 = por %p265, %p266
      %p268 = scmp.ne.s32.totalorder %s260, %s263
      %p269 = scmp.eq.s32.totalorder %s28, 0
      %p270 = por %p268, %p269
      %p271 = scmp.ne.s32.totalorder %s260, %s263
      %p272 = scmp.eq.s32.totalorder %s33, 5
      %p273 = por %p271, %p272
      %p274 = scmp.ne.s32.totalorder %s263, %s264
      %p275 = scmp.eq.s32.totalorder %s33, 0
      %p276 = por %p274, %p275
      %p277 = scmp.ne.s32.totalorder %s263, %s264
      %p278 = scmp.eq.s32.totalorder %s34, 5
      %p279 = por %p277, %p278
      %p281 = scmp.ne.s32.totalorder %s264, %s280
      %p282 = scmp.eq.s32.totalorder %s34, 0
      %p283 = por %p281, %p282
      %p284 = scmp.le.s32.totalorder 1, %s28
      %p285 = scmp.lt.s32.totalorder %s28, 7
      %p286 = pnand %p284, %p285
      %p287 = pneg %p286
      // Predicated region
      $region9: #{tpu_custom_call.1} parent=5 // pred_check
        _
      $region10: #{tpu_custom_call.1} parent=5 // pred_check_branch
        %289 = sbr.rel (%p286) target = $region12
      $region11: #{tpu_custom_call.1} parent=5 // pred_region
        %s290 = ssub.s32 %s28, 1
        // Predicated region
        $region13: #{tpu_custom_call.1} parent=11 // pred_check
          %p291 = pneg %p157
        $region14: #{tpu_custom_call.1} parent=11 // pred_check_branch
          %293 = sbr.rel (%p291) target = $region16
        $region15: #{tpu_custom_call.1} parent=11 // pred_region
          %s295 = ssub.s32 6144, 6144
          %296 = vsyncadd [#allocation9], %s295
          %s297 = sshll.u32 [#allocation8], 4
          %s298 = int_to_ptr.vmem [resolvable:$true] %s297
          %303 = dma.hbm_to_vmem [thread:$0]  %s3, 6144, %s298, [#allocation9], 128, 128, 8
        $region16: #{tpu_custom_call.1} parent=11 // pred_fallthru
          _
        // Predicated region
        $region17: #{tpu_custom_call.1} parent=11 // pred_check
          %p304 = pneg %p178
        $region18: #{tpu_custom_call.1} parent=11 // pred_check_branch
          %306 = sbr.rel (%p304) target = $region20
        $region19: #{tpu_custom_call.1} parent=11 // pred_region
          _
        $region20: #{tpu_custom_call.1} parent=11 // pred_fallthru
          _
        // Predicated region
        $region21: #{tpu_custom_call.1} parent=11 // pred_check
          %p307 = pneg %p199
        $region22: #{tpu_custom_call.1} parent=11 // pred_check_branch
          %309 = sbr.rel (%p307) target = $region24
        $region23: #{tpu_custom_call.1} parent=11 // pred_region
          %s311 = ssub.s32 2048, 2048
          %312 = vsyncadd [#allocation9], %s311
          %s313 = sshll.u32 [#allocation10], 4
          %s314 = int_to_ptr.vmem [resolvable:$true] %s313
          %319 = dma.hbm_to_vmem [thread:$0]  %s5, 2048, %s314, [#allocation9], 128, 128, 8
        $region24: #{tpu_custom_call.1} parent=11 // pred_fallthru
          _
        // Predicated region
        $region25: #{tpu_custom_call.1} parent=11 // pred_check
          %p320 = pneg %p220
        $region26: #{tpu_custom_call.1} parent=11 // pred_check_branch
          %322 = sbr.rel (%p320) target = $region28
        $region27: #{tpu_custom_call.1} parent=11 // pred_region
          _
        $region28: #{tpu_custom_call.1} parent=11 // pred_fallthru
          _
      $region12: #{tpu_custom_call.1} parent=5 // pred_fallthru
        _
      %p323 = scmp.lt.s32.totalorder %s28, 6
      // Predicated region
      $region29: #{tpu_custom_call.1} parent=5 // pred_check
        %p324 = pneg %p323
      $region30: #{tpu_custom_call.1} parent=5 // pred_check_branch
        %326 = sbr.rel (%p324) target = $region32
      $region31: #{tpu_custom_call.1} parent=5 // pred_region
        // Predicated region
        $region33: #{tpu_custom_call.1} parent=31 // pred_check
          %p327 = pneg %p62
        $region34: #{tpu_custom_call.1} parent=31 // pred_check_branch
          %329 = sbr.rel (%p327) target = $region36
        $region35: #{tpu_custom_call.1} parent=31 // pred_region
          %s330 = sand.u32 %s52, 1
          %s331 = scalar_lea.sflag [#allocation3], %s330
          %s332 = sand.u32 %s52, 1
          %s333 = smul.addr %s332, 8
          %s334 = scalar_lea.vmem [#allocation2], %s333
          %s335 = smul.u32 2, %s36
          %s337 = ssub.s32 128, 128
          %338 = vsyncadd %s331, %s337
          %s339 = smul.addr %s35, 6
          %s340 = sadd.s32 %s335, %s339
          %s341 = smul.addr %s340, 64
          %s342 = scalar_lea.hbm %s0, %s341
          %s343 = sshll.u32 %s334, 4
          %s344 = int_to_ptr.vmem [resolvable:$true] %s343
          %349 = dma.hbm_to_vmem [thread:$0]  %s342, 128, %s344, %s331, 64, 64, 4
        $region36: #{tpu_custom_call.1} parent=31 // pred_fallthru
          _
        // Predicated region
        $region37: #{tpu_custom_call.1} parent=31 // pred_check
          %p350 = pneg %p96
        $region38: #{tpu_custom_call.1} parent=31 // pred_check_branch
          %352 = sbr.rel (%p350) target = $region40
        $region39: #{tpu_custom_call.1} parent=31 // pred_region
          %s353 = sand.u32 %s28, 1
          %s354 = scalar_lea.sflag [#allocation6], %s353
          %s355 = sand.u32 %s86, 1
          %s356 = smul.addr %s355, 8
          %s357 = scalar_lea.vmem [#allocation5], %s356
          %s358 = ssub.s32 %s36, 1
          %p359 = scmp.gt.s32.totalorder %s358, 0
          %s360 = scalar_select %p359, %s358, 0
          %s361 = smul.u32 2, %s360
          %s363 = ssub.s32 128, 128
          %364 = vsyncadd %s354, %s363
          %s365 = smul.addr %s35, 6
          %s366 = sadd.s32 %s361, %s365
          %s367 = smul.addr %s366, 64
          %s368 = scalar_lea.hbm %s1, %s367
          %s369 = sshll.u32 %s357, 4
          %s370 = int_to_ptr.vmem [resolvable:$true] %s369
          %375 = dma.hbm_to_vmem [thread:$0]  %s368, 128, %s370, %s354, 64, 64, 4
        $region40: #{tpu_custom_call.1} parent=31 // pred_fallthru
          _
        // Predicated region
        $region41: #{tpu_custom_call.1} parent=31 // pred_check
          %p376 = pneg %p130
        $region42: #{tpu_custom_call.1} parent=31 // pred_check_branch
          %378 = sbr.rel (%p376) target = $region44
        $region43: #{tpu_custom_call.1} parent=31 // pred_region
          %s379 = sand.u32 %s28, 1
          %s380 = scalar_lea.sflag [#allocation6], %s379
          %s381 = sand.u32 %s120, 1
          %s382 = smul.addr %s381, 8
          %s383 = scalar_lea.vmem [#allocation7], %s382
          %s384 = sadd.s32 %s36, 1
          %p385 = scmp.lt.s32.totalorder %s384, 2
          %s386 = scalar_select %p385, %s384, 2
          %s387 = smul.u32 2, %s386
          %s389 = ssub.s32 128, 128
          %390 = vsyncadd %s380, %s389
          %s391 = smul.addr %s35, 6
          %s392 = sadd.s32 %s387, %s391
          %s393 = smul.addr %s392, 64
          %s394 = scalar_lea.hbm %s2, %s393
          %s395 = sshll.u32 %s383, 4
          %s396 = int_to_ptr.vmem [resolvable:$true] %s395
          %401 = dma.hbm_to_vmem [thread:$0]  %s394, 128, %s396, %s380, 64, 64, 4
        $region44: #{tpu_custom_call.1} parent=31 // pred_fallthru
          _
      $region32: #{tpu_custom_call.1} parent=5 // pred_fallthru
        _
      %p402 = scmp.le.s32.totalorder 1, %s28
      %p403 = scmp.lt.s32.totalorder %s28, 7
      %p404 = pnand %p402, %p403
      %p405 = pneg %p404
      // Predicated region
      $region45: #{tpu_custom_call.1} parent=5 // pred_check
        _
      $region46: #{tpu_custom_call.1} parent=5 // pred_check_branch
        %407 = sbr.rel (%p404) target = $region48
      $region47: #{tpu_custom_call.1} parent=5 // pred_region
        %s408 = ssub.s32 %s28, 1
        %s409 = sand.u32 %s55, 1
        %s410 = scalar_lea.sflag [#allocation3], %s409
        %s411 = sand.u32 %s55, 1
        %s412 = smul.addr %s411, 8
        %s413 = scalar_lea.vmem [#allocation2], %s412
        // Predicated region
        $region49: #{tpu_custom_call.1} parent=47 // pred_check
          %p414 = pneg %p68
        $region50: #{tpu_custom_call.1} parent=47 // pred_check_branch
          %416 = sbr.rel (%p414) target = $region52
        $region51: #{tpu_custom_call.1} parent=47 // pred_region
          %417 = dma.done %s410, 128
        $region52: #{tpu_custom_call.1} parent=47 // pred_fallthru
          _
        %s418 = sand.u32 %s33, 1
        %s419 = scalar_lea.sflag [#allocation6], %s418
        %s420 = sand.u32 %s89, 1
        %s421 = smul.addr %s420, 8
        %s422 = scalar_lea.vmem [#allocation5], %s421
        // Predicated region
        $region53: #{tpu_custom_call.1} parent=47 // pred_check
          %p423 = pneg %p102
        $region54: #{tpu_custom_call.1} parent=47 // pred_check_branch
          %425 = sbr.rel (%p423) target = $region56
        $region55: #{tpu_custom_call.1} parent=47 // pred_region
          %426 = dma.done %s419, 128
        $region56: #{tpu_custom_call.1} parent=47 // pred_fallthru
          _
        %s427 = sand.u32 %s33, 1
        %s428 = scalar_lea.sflag [#allocation6], %s427
        %s429 = sand.u32 %s123, 1
        %s430 = smul.addr %s429, 8
        %s431 = scalar_lea.vmem [#allocation7], %s430
        // Predicated region
        $region57: #{tpu_custom_call.1} parent=47 // pred_check
          %p432 = pneg %p136
        $region58: #{tpu_custom_call.1} parent=47 // pred_check_branch
          %434 = sbr.rel (%p432) target = $region60
        $region59: #{tpu_custom_call.1} parent=47 // pred_region
          %435 = dma.done %s428, 128
        $region60: #{tpu_custom_call.1} parent=47 // pred_fallthru
          _
        // Predicated region
        $region61: #{tpu_custom_call.1} parent=47 // pred_check
          %p436 = pneg %p157
        $region62: #{tpu_custom_call.1} parent=47 // pred_check_branch
          %438 = sbr.rel (%p436) target = $region64
        $region63: #{tpu_custom_call.1} parent=47 // pred_region
          %439 = dma.done [#allocation9], 6144
        $region64: #{tpu_custom_call.1} parent=47 // pred_fallthru
          _
        // Predicated region
        $region65: #{tpu_custom_call.1} parent=47 // pred_check
          %p440 = pneg %p199
        $region66: #{tpu_custom_call.1} parent=47 // pred_check_branch
          %442 = sbr.rel (%p440) target = $region68
        $region67: #{tpu_custom_call.1} parent=47 // pred_region
          %443 = dma.done [#allocation9], 2048
        $region68: #{tpu_custom_call.1} parent=47 // pred_fallthru
          _
        %s444 = sand.u32 %s55, 1
        %s445 = scalar_lea.sflag [#allocation3], %s444
        %s446 = sand.u32 %s55, 1
        %s447 = smul.addr %s446, 8
        %s448 = scalar_lea.vmem [#allocation2], %s447
        %p449 = pneg %p68
        %p450 = pneg %p65
        %s451 = sand.u32 %s33, 1
        %s452 = scalar_lea.sflag [#allocation6], %s451
        %s453 = sand.u32 %s89, 1
        %s454 = smul.addr %s453, 8
        %s455 = scalar_lea.vmem [#allocation5], %s454
        %p456 = pneg %p102
        %p457 = pneg %p99
        %s458 = sand.u32 %s33, 1
        %s459 = scalar_lea.sflag [#allocation6], %s458
        %s460 = sand.u32 %s123, 1
        %s461 = smul.addr %s460, 8
        %s462 = scalar_lea.vmem [#allocation7], %s461
        %p463 = pneg %p136
        %p464 = pneg %p133
        %p465 = pneg %p157
        %p466 = pneg %p154
        %p467 = pneg %p178
        %p468 = pneg %p175
        %p469 = pneg %p199
        %p470 = pneg %p196
        %p471 = pneg %p220
        %p472 = pneg %p217
        %p473 = pneg %p248
        %p474 = pneg %p245
        %s475 = sand.u32 %s235, 1
        %s476 = scalar_lea.sflag [#allocation4], %s475
        %s477 = sand.u32 %s235, 1
        %s478 = smul.addr %s477, 8
        %s479 = scalar_lea.vmem [#allocation11], %s478
        %p480 = pneg %p276
        %p481 = pneg %p273
        %s482 = sand.u32 %s263, 1
        %s483 = scalar_lea.sflag [#allocation13], %s482
        %s484 = sand.u32 %s263, 1
        %s485 = smul.addr %s484, 8
        %s486 = scalar_lea.vmem [#allocation12], %s485
        %s487 = smul.u32 2, %s38
        %s488 = ssub.s32 %s38, 1
        %p489 = scmp.gt.s32.totalorder %s488, 0
        %s490 = scalar_select %p489, %s488, 0
        %s491 = smul.u32 2, %s490
        %s492 = sadd.s32 %s38, 1
        %p493 = scmp.lt.s32.totalorder %s492, 2
        %s494 = scalar_select %p493, %s492, 2
        %s495 = smul.u32 2, %s494
        %s496 = smul.u32 2, %s38
        %s497 = smul.u32 2, %s38
        %v502 = vld [vmem:[%s413] sm:$0xf]
        %v503 = vld [vmem:[%s413 + $0x4] sm:$0xf]
        %v504 = vld [vmem:[%s422 + $0x4] sm:$0xc]
        %v505 = vld [vmem:[%s431] sm:$0x3]
        %v507 = vunpack.c.l.b16 %v504
        %v508 = vpack.c.b16 %v507, %v507
        %v510 = vshrl.u32 %v508, 16
        %v512 = vrot.slane %v510, 2
        %v513 = vshll.u32 %v508, 16
        %v515 = vrot.slane %v513, 3
        %v516 = vor.u32 %v512, %v515
        %v520 = vunpack.c.l.b16 %v502
        %v521 = vunpack.c.l.b16 %v503
        %v522 = vpack.c.b16 %v521, %v520
        %v524 = vshrl.u32 %v522, 16
        %v526 = vrot.slane %v524, 6
        %v527 = vshll.u32 %v522, 16
        %v529 = vrot.slane %v527, 7
        %v530 = vor.u32 %v526, %v529
        %vm532 = vcmask 1041408
        %vm533 = vsmask.f32 1280
        %vm534 = vmand %vm532, %vm533
        %v535 = vsel %vm534, %v516, %v530
        %v536 = vrot.slane %v524, 1
        %v537 = vrot.slane %v527, 2
        %v538 = vor.u32 %v536, %v537
        %v541 = vunpack.c.l.b16 %v505
        %v542 = vpack.c.b16 %v541, %v541
        %v544 = vshrl.u32 %v542, 16
        %v546 = vrot.slane %v544, 1
        %v547 = vshll.u32 %v542, 16
        %v549 = vrot.slane %v547, 2
        %v550 = vor.u32 %v546, %v549
        %vm552 = vcmask 1046528
        %vm553 = vsmask.f32 6400
        %vm554 = vmand %vm552, %vm553
        %v555 = vsel %vm554, %v538, %v550
        %v556 = vlaneseq
        %v557 = vshrl.u32 %v556, 7
        %v558 = vadd.s32 %v557, 8
        %s559 = smul.u32 %s38, 16
        %v560 = vstv %s559
        %v561 = vadd.s32 %v557, %v560
        %v562 = vadd.s32 %v558, %v560
        %vm563 = vcmp.ge.s32.totalorder %v561, 3
        %vm564 = vcmp.ge.s32.totalorder %v562, 3
        %v565 = vsel %vm563, 1, 0
        %v566 = vsel %vm564, 1, 0
        %vm567 = vcmp.eq.s32.totalorder %v565, 1
        %vm568 = vcmp.eq.s32.totalorder %v566, 1
        %vm569 = vmpackc.low %vm567, %vm567
        %vm570 = vmpackc.low %vm568, %vm568
        %v571 = vsel %vm569, 65537, 0
        %v572 = vsel %vm570, 65537, 0
        %v573 = vunpack.c.l.b16 %v571
        %v574 = vunpack.c.l.b16 %v572
        %v575 = vpack.c.b16 %v574, %v573
        %vm576 = vcmp.ne.s16.totalorder %v575, 0
        %v577 = vsel %vm576, %v535, 0
        %vm578 = vcmp.lt.s32.totalorder %v561, 45
        %vm579 = vcmp.lt.s32.totalorder %v562, 45
        %v580 = vsel %vm578, 1, 0
        %v581 = vsel %vm579, 1, 0
        %vm582 = vcmp.eq.s32.totalorder %v580, 1
        %vm583 = vcmp.eq.s32.totalorder %v581, 1
        %vm584 = vmpackc.low %vm582, %vm582
        %vm585 = vmpackc.low %vm583, %vm583
        %v586 = vsel %vm584, 65537, 0
        %v587 = vsel %vm585, 65537, 0
        %v588 = vunpack.c.l.b16 %v586
        %v589 = vunpack.c.l.b16 %v587
        %v590 = vpack.c.b16 %v589, %v588
        %vm591 = vcmp.ne.s16.totalorder %v590, 0
        %v592 = vsel %vm591, %v555, 0
        %v593 = vld [vmem:[#allocation8] sm:$0xff]
        %v594 = vld [vmem:[#allocation8 + $0x8] sm:$0xff]
        %v595 = vld [vmem:[#allocation8 + $0x10] sm:$0xff]
        %v596 = vld [vmem:[#allocation8 + $0x18] sm:$0xff]
        %v597 = vld [vmem:[#allocation8 + $0x20] sm:$0xff]
        %v598 = vld [vmem:[#allocation8 + $0x28] sm:$0xff]
        %v599 = vld [vmem:[#allocation8 + $0x30] sm:$0xff]
        %v600 = vld [vmem:[#allocation8 + $0x38] sm:$0xff]
        %v601 = vld [vmem:[#allocation8 + $0x40] sm:$0xff]
        %v602 = vld [vmem:[#allocation8 + $0x48] sm:$0xff]
        %v603 = vld [vmem:[#allocation8 + $0x50] sm:$0xff]
        %v604 = vld [vmem:[#allocation8 + $0x58] sm:$0xff]
        %v605 = vld [vmem:[#allocation8 + $0x60] sm:$0xff]
        %v606 = vld [vmem:[#allocation8 + $0x68] sm:$0xff]
        %v607 = vld [vmem:[#allocation8 + $0x70] sm:$0xff]
        %v608 = vld [vmem:[#allocation8 + $0x78] sm:$0xff]
        %s609 = scalar_lea.vmem [#allocation8], 128
        %v610 = vld [vmem:[%s609] sm:$0xff]
        %v611 = vld [vmem:[%s609 + $0x8] sm:$0xff]
        %v612 = vld [vmem:[%s609 + $0x10] sm:$0xff]
        %v613 = vld [vmem:[%s609 + $0x18] sm:$0xff]
        %v614 = vld [vmem:[%s609 + $0x20] sm:$0xff]
        %v615 = vld [vmem:[%s609 + $0x28] sm:$0xff]
        %v616 = vld [vmem:[%s609 + $0x30] sm:$0xff]
        %v617 = vld [vmem:[%s609 + $0x38] sm:$0xff]
        %v618 = vld [vmem:[%s609 + $0x40] sm:$0xff]
        %v619 = vld [vmem:[%s609 + $0x48] sm:$0xff]
        %v620 = vld [vmem:[%s609 + $0x50] sm:$0xff]
        %v621 = vld [vmem:[%s609 + $0x58] sm:$0xff]
        %v622 = vld [vmem:[%s609 + $0x60] sm:$0xff]
        %v623 = vld [vmem:[%s609 + $0x68] sm:$0xff]
        %v624 = vld [vmem:[%s609 + $0x70] sm:$0xff]
        %v625 = vld [vmem:[%s609 + $0x78] sm:$0xff]
        %v643 = vunpack.c.l.b16 %v610
        %v644 = vunpack.c.h.b16 %v610
        %v645 = vunpack.c.l.b16 %v611
        %v646 = vunpack.c.h.b16 %v611
        %v647 = vunpack.c.l.b16 %v612
        %v648 = vunpack.c.h.b16 %v612
        %v649 = vunpack.c.l.b16 %v613
        %v650 = vunpack.c.h.b16 %v613
        %v651 = vunpack.c.l.b16 %v614
        %v652 = vunpack.c.h.b16 %v614
        %v653 = vunpack.c.l.b16 %v615
        %v654 = vunpack.c.h.b16 %v615
        %v655 = vunpack.c.l.b16 %v616
        %v656 = vunpack.c.h.b16 %v616
        %v657 = vunpack.c.l.b16 %v617
        %v658 = vunpack.c.h.b16 %v617
        %v659 = vunpack.c.l.b16 %v618
        %v660 = vunpack.c.h.b16 %v618
        %v661 = vunpack.c.l.b16 %v619
        %v662 = vunpack.c.h.b16 %v619
        %v663 = vunpack.c.l.b16 %v620
        %v664 = vunpack.c.h.b16 %v620
        %v665 = vunpack.c.l.b16 %v621
        %v666 = vunpack.c.h.b16 %v621
        %v667 = vunpack.c.l.b16 %v622
        %v668 = vunpack.c.h.b16 %v622
        %v669 = vunpack.c.l.b16 %v623
        %v670 = vunpack.c.h.b16 %v623
        %v671 = vunpack.c.l.b16 %v624
        %v672 = vunpack.c.h.b16 %v624
        %v673 = vunpack.c.l.b16 %v625
        %v674 = vunpack.c.h.b16 %v625
        %v675 = vpack.c.b16 %v645, %v643
        %v676 = vpack.c.b16 %v646, %v644
        %v677 = vpack.c.b16 %v649, %v647
        %v678 = vpack.c.b16 %v650, %v648
        %v679 = vpack.c.b16 %v653, %v651
        %v680 = vpack.c.b16 %v654, %v652
        %v681 = vpack.c.b16 %v657, %v655
        %v682 = vpack.c.b16 %v658, %v656
        %v683 = vpack.c.b16 %v661, %v659
        %v684 = vpack.c.b16 %v662, %v660
        %v685 = vpack.c.b16 %v665, %v663
        %v686 = vpack.c.b16 %v666, %v664
        %v687 = vpack.c.b16 %v669, %v667
        %v688 = vpack.c.b16 %v670, %v668
        %v689 = vpack.c.b16 %v673, %v671
        %v690 = vpack.c.b16 %v674, %v672
        %707 = vmatprep.subr.bf16.mxu0 %v690
        %708 = vmatpush1.bf16.msra.mxu0 %v689
        %709 = vmatprep.subr.bf16.mxu0 %v688
        %710 = vmatpush1.bf16.msra.mxu0 %v687
        %711 = vmatprep.subr.bf16.mxu0 %v686
        %712 = vmatpush1.bf16.msra.mxu0 %v685
        %713 = vmatprep.subr.bf16.mxu0 %v684
        %714 = vmatpush1.bf16.msra.mxu0 %v683
        %715 = vmatprep.subr.bf16.mxu0 %v682
        %716 = vmatpush1.bf16.msra.mxu0 %v681
        %717 = vmatprep.subr.bf16.mxu0 %v680
        %718 = vmatpush1.bf16.msra.mxu0 %v679
        %719 = vmatprep.subr.bf16.mxu0 %v678
        %720 = vmatpush1.bf16.msra.mxu0 %v677
        %721 = vmatprep.subr.bf16.mxu0 %v676
        %722 = vmatpush1.bf16.msra.mxu0 %v675
        %723 = vmatprep.subr.bf16.mxu0 0
        %724 = vmatpush2.bf16.msra.mxu0 0
        %725 = vmatprep.subr.bf16.mxu0 0
        %726 = vmatpush2.bf16.msra.mxu0 0
        %727 = vmatprep.subr.bf16.mxu0 0
        %728 = vmatpush2.bf16.msra.mxu0 0
        %729 = vmatprep.subr.bf16.mxu0 0
        %730 = vmatpush2.bf16.msra.mxu0 0
        %731 = vmatprep.subr.bf16.mxu0 0
        %732 = vmatpush2.bf16.msra.mxu0 0
        %733 = vmatprep.subr.bf16.mxu0 0
        %734 = vmatpush2.bf16.msra.mxu0 0
        %735 = vmatprep.subr.bf16.mxu0 0
        %736 = vmatpush2.bf16.msra.mxu0 0
        %737 = vmatprep.subr.bf16.mxu0 0
        %738 = vmatpush2.bf16.msra.mxu0 0
        %739 = vmatprep.mubr.bf16.mxu0 0
        %740 = vmatmul.mubr.bf16.gmra.mxu0 %v522
        %v741 = vpop.f32.mrf.mxu0
        %v742 = vadd.f32 0.0, %v741
        %v743 = vpop.f32.mrf.mxu0
        %v744 = vadd.f32 0.0, %v743
        %v745 = vpop.f32.mrf.mxu0
        %v746 = vadd.f32 0.0, %v745
        %v747 = vpop.f32.mrf.mxu0
        %v748 = vadd.f32 0.0, %v747
        %749 = vdwg.mxu0
        %v766 = vunpack.c.l.b16 %v593
        %v767 = vunpack.c.h.b16 %v593
        %v768 = vunpack.c.l.b16 %v594
        %v769 = vunpack.c.h.b16 %v594
        %v770 = vunpack.c.l.b16 %v595
        %v771 = vunpack.c.h.b16 %v595
        %v772 = vunpack.c.l.b16 %v596
        %v773 = vunpack.c.h.b16 %v596
        %v774 = vunpack.c.l.b16 %v597
        %v775 = vunpack.c.h.b16 %v597
        %v776 = vunpack.c.l.b16 %v598
        %v777 = vunpack.c.h.b16 %v598
        %v778 = vunpack.c.l.b16 %v599
        %v779 = vunpack.c.h.b16 %v599
        %v780 = vunpack.c.l.b16 %v600
        %v781 = vunpack.c.h.b16 %v600
        %v782 = vunpack.c.l.b16 %v601
        %v783 = vunpack.c.h.b16 %v601
        %v784 = vunpack.c.l.b16 %v602
        %v785 = vunpack.c.h.b16 %v602
        %v786 = vunpack.c.l.b16 %v603
        %v787 = vunpack.c.h.b16 %v603
        %v788 = vunpack.c.l.b16 %v604
        %v789 = vunpack.c.h.b16 %v604
        %v790 = vunpack.c.l.b16 %v605
        %v791 = vunpack.c.h.b16 %v605
        %v792 = vunpack.c.l.b16 %v606
        %v793 = vunpack.c.h.b16 %v606
        %v794 = vunpack.c.l.b16 %v607
        %v795 = vunpack.c.h.b16 %v607
        %v796 = vunpack.c.l.b16 %v608
        %v797 = vunpack.c.h.b16 %v608
        %v798 = vpack.c.b16 %v768, %v766
        %v799 = vpack.c.b16 %v769, %v767
        %v800 = vpack.c.b16 %v772, %v770
        %v801 = vpack.c.b16 %v773, %v771
        %v802 = vpack.c.b16 %v776, %v774
        %v803 = vpack.c.b16 %v777, %v775
        %v804 = vpack.c.b16 %v780, %v778
        %v805 = vpack.c.b16 %v781, %v779
        %v806 = vpack.c.b16 %v784, %v782
        %v807 = vpack.c.b16 %v785, %v783
        %v808 = vpack.c.b16 %v788, %v786
        %v809 = vpack.c.b16 %v789, %v787
        %v810 = vpack.c.b16 %v792, %v790
        %v811 = vpack.c.b16 %v793, %v791
        %v812 = vpack.c.b16 %v796, %v794
        %v813 = vpack.c.b16 %v797, %v795
        %830 = vmatprep.subr.bf16.mxu0 %v813
        %831 = vmatpush1.bf16.msra.mxu0 %v812
        %832 = vmatprep.subr.bf16.mxu0 %v811
        %833 = vmatpush1.bf16.msra.mxu0 %v810
        %834 = vmatprep.subr.bf16.mxu0 %v809
        %835 = vmatpush1.bf16.msra.mxu0 %v808
        %836 = vmatprep.subr.bf16.mxu0 %v807
        %837 = vmatpush1.bf16.msra.mxu0 %v806
        %838 = vmatprep.subr.bf16.mxu0 %v805
        %839 = vmatpush1.bf16.msra.mxu0 %v804
        %840 = vmatprep.subr.bf16.mxu0 %v803
        %841 = vmatpush1.bf16.msra.mxu0 %v802
        %842 = vmatprep.subr.bf16.mxu0 %v801
        %843 = vmatpush1.bf16.msra.mxu0 %v800
        %844 = vmatprep.subr.bf16.mxu0 %v799
        %845 = vmatpush1.bf16.msra.mxu0 %v798
        %846 = vmatprep.subr.bf16.mxu0 0
        %847 = vmatpush2.bf16.msra.mxu0 0
        %848 = vmatprep.subr.bf16.mxu0 0
        %849 = vmatpush2.bf16.msra.mxu0 0
        %850 = vmatprep.subr.bf16.mxu0 0
        %851 = vmatpush2.bf16.msra.mxu0 0
        %852 = vmatprep.subr.bf16.mxu0 0
        %853 = vmatpush2.bf16.msra.mxu0 0
        %854 = vmatprep.subr.bf16.mxu0 0
        %855 = vmatpush2.bf16.msra.mxu0 0
        %856 = vmatprep.subr.bf16.mxu0 0
        %857 = vmatpush2.bf16.msra.mxu0 0
        %858 = vmatprep.subr.bf16.mxu0 0
        %859 = vmatpush2.bf16.msra.mxu0 0
        %860 = vmatprep.subr.bf16.mxu0 0
        %861 = vmatpush2.bf16.msra.mxu0 0
        %862 = vmatprep.mubr.bf16.mxu0 0
        %863 = vmatmul.mubr.bf16.gmra.mxu0 %v577
        %v864 = vpop.f32.mrf.mxu0
        %v865 = vadd.f32 %v742, %v864
        %v866 = vpop.f32.mrf.mxu0
        %v867 = vadd.f32 %v744, %v866
        %v868 = vpop.f32.mrf.mxu0
        %v869 = vadd.f32 %v746, %v868
        %v870 = vpop.f32.mrf.mxu0
        %v871 = vadd.f32 %v748, %v870
        %872 = vdwg.mxu0
        %s873 = scalar_lea.vmem [#allocation8], 256
        %v874 = vld [vmem:[%s873] sm:$0xff]
        %v875 = vld [vmem:[%s873 + $0x8] sm:$0xff]
        %v876 = vld [vmem:[%s873 + $0x10] sm:$0xff]
        %v877 = vld [vmem:[%s873 + $0x18] sm:$0xff]
        %v878 = vld [vmem:[%s873 + $0x20] sm:$0xff]
        %v879 = vld [vmem:[%s873 + $0x28] sm:$0xff]
        %v880 = vld [vmem:[%s873 + $0x30] sm:$0xff]
        %v881 = vld [vmem:[%s873 + $0x38] sm:$0xff]
        %v882 = vld [vmem:[%s873 + $0x40] sm:$0xff]
        %v883 = vld [vmem:[%s873 + $0x48] sm:$0xff]
        %v884 = vld [vmem:[%s873 + $0x50] sm:$0xff]
        %v885 = vld [vmem:[%s873 + $0x58] sm:$0xff]
        %v886 = vld [vmem:[%s873 + $0x60] sm:$0xff]
        %v887 = vld [vmem:[%s873 + $0x68] sm:$0xff]
        %v888 = vld [vmem:[%s873 + $0x70] sm:$0xff]
        %v889 = vld [vmem:[%s873 + $0x78] sm:$0xff]
        %v906 = vunpack.c.l.b16 %v874
        %v907 = vunpack.c.h.b16 %v874
        %v908 = vunpack.c.l.b16 %v875
        %v909 = vunpack.c.h.b16 %v875
        %v910 = vunpack.c.l.b16 %v876
        %v911 = vunpack.c.h.b16 %v876
        %v912 = vunpack.c.l.b16 %v877
        %v913 = vunpack.c.h.b16 %v877
        %v914 = vunpack.c.l.b16 %v878
        %v915 = vunpack.c.h.b16 %v878
        %v916 = vunpack.c.l.b16 %v879
        %v917 = vunpack.c.h.b16 %v879
        %v918 = vunpack.c.l.b16 %v880
        %v919 = vunpack.c.h.b16 %v880
        %v920 = vunpack.c.l.b16 %v881
        %v921 = vunpack.c.h.b16 %v881
        %v922 = vunpack.c.l.b16 %v882
        %v923 = vunpack.c.h.b16 %v882
        %v924 = vunpack.c.l.b16 %v883
        %v925 = vunpack.c.h.b16 %v883
        %v926 = vunpack.c.l.b16 %v884
        %v927 = vunpack.c.h.b16 %v884
        %v928 = vunpack.c.l.b16 %v885
        %v929 = vunpack.c.h.b16 %v885
        %v930 = vunpack.c.l.b16 %v886
        %v931 = vunpack.c.h.b16 %v886
        %v932 = vunpack.c.l.b16 %v887
        %v933 = vunpack.c.h.b16 %v887
        %v934 = vunpack.c.l.b16 %v888
        %v935 = vunpack.c.h.b16 %v888
        %v936 = vunpack.c.l.b16 %v889
        %v937 = vunpack.c.h.b16 %v889
        %v938 = vpack.c.b16 %v908, %v906
        %v939 = vpack.c.b16 %v909, %v907
        %v940 = vpack.c.b16 %v912, %v910
        %v941 = vpack.c.b16 %v913, %v911
        %v942 = vpack.c.b16 %v916, %v914
        %v943 = vpack.c.b16 %v917, %v915
        %v944 = vpack.c.b16 %v920, %v918
        %v945 = vpack.c.b16 %v921, %v919
        %v946 = vpack.c.b16 %v924, %v922
        %v947 = vpack.c.b16 %v925, %v923
        %v948 = vpack.c.b16 %v928, %v926
        %v949 = vpack.c.b16 %v929, %v927
        %v950 = vpack.c.b16 %v932, %v930
        %v951 = vpack.c.b16 %v933, %v931
        %v952 = vpack.c.b16 %v936, %v934
        %v953 = vpack.c.b16 %v937, %v935
        %970 = vmatprep.subr.bf16.mxu0 %v953
        %971 = vmatpush1.bf16.msra.mxu0 %v952
        %972 = vmatprep.subr.bf16.mxu0 %v951
        %973 = vmatpush1.bf16.msra.mxu0 %v950
        %974 = vmatprep.subr.bf16.mxu0 %v949
        %975 = vmatpush1.bf16.msra.mxu0 %v948
        %976 = vmatprep.subr.bf16.mxu0 %v947
        %977 = vmatpush1.bf16.msra.mxu0 %v946
        %978 = vmatprep.subr.bf16.mxu0 %v945
        %979 = vmatpush1.bf16.msra.mxu0 %v944
        %980 = vmatprep.subr.bf16.mxu0 %v943
        %981 = vmatpush1.bf16.msra.mxu0 %v942
        %982 = vmatprep.subr.bf16.mxu0 %v941
        %983 = vmatpush1.bf16.msra.mxu0 %v940
        %984 = vmatprep.subr.bf16.mxu0 %v939
        %985 = vmatpush1.bf16.msra.mxu0 %v938
        %986 = vmatprep.subr.bf16.mxu0 0
        %987 = vmatpush2.bf16.msra.mxu0 0
        %988 = vmatprep.subr.bf16.mxu0 0
        %989 = vmatpush2.bf16.msra.mxu0 0
        %990 = vmatprep.subr.bf16.mxu0 0
        %991 = vmatpush2.bf16.msra.mxu0 0
        %992 = vmatprep.subr.bf16.mxu0 0
        %993 = vmatpush2.bf16.msra.mxu0 0
        %994 = vmatprep.subr.bf16.mxu0 0
        %995 = vmatpush2.bf16.msra.mxu0 0
        %996 = vmatprep.subr.bf16.mxu0 0
        %997 = vmatpush2.bf16.msra.mxu0 0
        %998 = vmatprep.subr.bf16.mxu0 0
        %999 = vmatpush2.bf16.msra.mxu0 0
        %1000 = vmatprep.subr.bf16.mxu0 0
        %1001 = vmatpush2.bf16.msra.mxu0 0
        %1002 = vmatprep.mubr.bf16.mxu0 0
        %1003 = vmatmul.mubr.bf16.gmra.mxu0 %v592
        %v1004 = vpop.f32.mrf.mxu0
        %v1005 = vadd.f32 0.0, %v1004
        %v1006 = vpop.f32.mrf.mxu0
        %v1007 = vadd.f32 0.0, %v1006
        %v1008 = vpop.f32.mrf.mxu0
        %v1009 = vadd.f32 0.0, %v1008
        %v1010 = vpop.f32.mrf.mxu0
        %v1011 = vadd.f32 0.0, %v1010
        %1012 = vdwg.mxu0
        %v1013 = vadd.f32 %v865, %v1005
        %v1014 = vadd.f32 %v867, %v1007
        %v1015 = vadd.f32 %v869, %v1009
        %v1016 = vadd.f32 %v871, %v1011
        %v1017 = vld [vmem:[%s4] sm:$0x3]
        %v1019 = vlaneseq
        %v1020 = vshrl.u32 %v1019, 7
        %v1021 = vsub.s32 0, %v1020
        %v1022 = vrot.slane %v1017, %v1021
        %v1023 = vlaneseq
        %v1024 = vshrl.u32 %v1023, 7
        %v1025 = vsub.s32 1, %v1024
        %v1026 = vrot.slane %v1017, %v1025
        %v1029 = vadd.f32 %v1013, %v1022
        %v1030 = vadd.f32 %v1014, %v1026
        %v1031 = vadd.f32 %v1015, %v1022
        %v1032 = vadd.f32 %v1016, %v1026
        %v1033 = vpack.c.bf16 %v1031, %v1029
        %v1034 = vpack.c.bf16 %v1032, %v1030
        %v1035 = vxor.u32 %v1033, 2147516416
        %v1037 = vmul.bf16 %v1035, 1069105081
        %v1038 = vpow.bf16.pop %v1037
        %v1039 = vadd.bf16 %v1038, 1065369472
        %v1040 = vrcp.bf16.pop %v1039
        %v1041 = vmul.bf16 1065369472, %v1040
        %v1042 = vtanh.bf16.pop %v1034
        %v1043 = vmul.bf16 %v1041, %v1042
        %v1044 = vld [vmem:[#allocation10] sm:$0xff]
        %v1045 = vld [vmem:[#allocation10 + $0x8] sm:$0xff]
        %v1046 = vld [vmem:[#allocation10 + $0x10] sm:$0xff]
        %v1047 = vld [vmem:[#allocation10 + $0x18] sm:$0xff]
        %v1048 = vld [vmem:[#allocation10 + $0x20] sm:$0xff]
        %v1049 = vld [vmem:[#allocation10 + $0x28] sm:$0xff]
        %v1050 = vld [vmem:[#allocation10 + $0x30] sm:$0xff]
        %v1051 = vld [vmem:[#allocation10 + $0x38] sm:$0xff]
        %v1052 = vld [vmem:[#allocation10 + $0x40] sm:$0xff]
        %v1053 = vld [vmem:[#allocation10 + $0x48] sm:$0xff]
        %v1054 = vld [vmem:[#allocation10 + $0x50] sm:$0xff]
        %v1055 = vld [vmem:[#allocation10 + $0x58] sm:$0xff]
        %v1056 = vld [vmem:[#allocation10 + $0x60] sm:$0xff]
        %v1057 = vld [vmem:[#allocation10 + $0x68] sm:$0xff]
        %v1058 = vld [vmem:[#allocation10 + $0x70] sm:$0xff]
        %v1059 = vld [vmem:[#allocation10 + $0x78] sm:$0xff]
        %v1060 = vld [vmem:[%s6] sm:$0x3]
        %v1062 = vlaneseq
        %v1063 = vshrl.u32 %v1062, 7
        %v1064 = vsub.s32 0, %v1063
        %v1065 = vrot.slane %v1060, %v1064
        %v1066 = vlaneseq
        %v1067 = vshrl.u32 %v1066, 7
        %v1068 = vsub.s32 1, %v1067
        %v1069 = vrot.slane %v1060, %v1068
        %v1088 = vunpack.c.l.b16 %v1044
        %v1089 = vunpack.c.h.b16 %v1044
        %v1090 = vunpack.c.l.b16 %v1045
        %v1091 = vunpack.c.h.b16 %v1045
        %v1092 = vunpack.c.l.b16 %v1046
        %v1093 = vunpack.c.h.b16 %v1046
        %v1094 = vunpack.c.l.b16 %v1047
        %v1095 = vunpack.c.h.b16 %v1047
        %v1096 = vunpack.c.l.b16 %v1048
        %v1097 = vunpack.c.h.b16 %v1048
        %v1098 = vunpack.c.l.b16 %v1049
        %v1099 = vunpack.c.h.b16 %v1049
        %v1100 = vunpack.c.l.b16 %v1050
        %v1101 = vunpack.c.h.b16 %v1050
        %v1102 = vunpack.c.l.b16 %v1051
        %v1103 = vunpack.c.h.b16 %v1051
        %v1104 = vunpack.c.l.b16 %v1052
        %v1105 = vunpack.c.h.b16 %v1052
        %v1106 = vunpack.c.l.b16 %v1053
        %v1107 = vunpack.c.h.b16 %v1053
        %v1108 = vunpack.c.l.b16 %v1054
        %v1109 = vunpack.c.h.b16 %v1054
        %v1110 = vunpack.c.l.b16 %v1055
        %v1111 = vunpack.c.h.b16 %v1055
        %v1112 = vunpack.c.l.b16 %v1056
        %v1113 = vunpack.c.h.b16 %v1056
        %v1114 = vunpack.c.l.b16 %v1057
        %v1115 = vunpack.c.h.b16 %v1057
        %v1116 = vunpack.c.l.b16 %v1058
        %v1117 = vunpack.c.h.b16 %v1058
        %v1118 = vunpack.c.l.b16 %v1059
        %v1119 = vunpack.c.h.b16 %v1059
        %v1120 = vpack.c.b16 %v1090, %v1088
        %v1121 = vpack.c.b16 %v1091, %v1089
        %v1122 = vpack.c.b16 %v1094, %v1092
        %v1123 = vpack.c.b16 %v1095, %v1093
        %v1124 = vpack.c.b16 %v1098, %v1096
        %v1125 = vpack.c.b16 %v1099, %v1097
        %v1126 = vpack.c.b16 %v1102, %v1100
        %v1127 = vpack.c.b16 %v1103, %v1101
        %v1128 = vpack.c.b16 %v1106, %v1104
        %v1129 = vpack.c.b16 %v1107, %v1105
        %v1130 = vpack.c.b16 %v1110, %v1108
        %v1131 = vpack.c.b16 %v1111, %v1109
        %v1132 = vpack.c.b16 %v1114, %v1112
        %v1133 = vpack.c.b16 %v1115, %v1113
        %v1134 = vpack.c.b16 %v1118, %v1116
        %v1135 = vpack.c.b16 %v1119, %v1117
        %1152 = vmatprep.subr.bf16.mxu0 %v1135
        %1153 = vmatpush1.bf16.msra.mxu0 %v1134
        %1154 = vmatprep.subr.bf16.mxu0 %v1133
        %1155 = vmatpush1.bf16.msra.mxu0 %v1132
        %1156 = vmatprep.subr.bf16.mxu0 %v1131
        %1157 = vmatpush1.bf16.msra.mxu0 %v1130
        %1158 = vmatprep.subr.bf16.mxu0 %v1129
        %1159 = vmatpush1.bf16.msra.mxu0 %v1128
        %1160 = vmatprep.subr.bf16.mxu0 %v1127
        %1161 = vmatpush1.bf16.msra.mxu0 %v1126
        %1162 = vmatprep.subr.bf16.mxu0 %v1125
        %1163 = vmatpush1.bf16.msra.mxu0 %v1124
        %1164 = vmatprep.subr.bf16.mxu0 %v1123
        %1165 = vmatpush1.bf16.msra.mxu0 %v1122
        %1166 = vmatprep.subr.bf16.mxu0 %v1121
        %1167 = vmatpush1.bf16.msra.mxu0 %v1120
        %1168 = vmatprep.subr.bf16.mxu0 0
        %1169 = vmatpush2.bf16.msra.mxu0 0
        %1170 = vmatprep.subr.bf16.mxu0 0
        %1171 = vmatpush2.bf16.msra.mxu0 0
        %1172 = vmatprep.subr.bf16.mxu0 0
        %1173 = vmatpush2.bf16.msra.mxu0 0
        %1174 = vmatprep.subr.bf16.mxu0 0
        %1175 = vmatpush2.bf16.msra.mxu0 0
        %1176 = vmatprep.subr.bf16.mxu0 0
        %1177 = vmatpush2.bf16.msra.mxu0 0
        %1178 = vmatprep.subr.bf16.mxu0 0
        %1179 = vmatpush2.bf16.msra.mxu0 0
        %1180 = vmatprep.subr.bf16.mxu0 0
        %1181 = vmatpush2.bf16.msra.mxu0 0
        %1182 = vmatprep.subr.bf16.mxu0 0
        %1183 = vmatpush2.bf16.msra.mxu0 0
        %1184 = vmatprep.mubr.bf16.mxu0 0
        %1185 = vmatmul.mubr.bf16.gmra.mxu0 %v1043
        %v1186 = vpop.f32.mrf.mxu0
        %v1187 = vadd.f32 %v1065, %v1186
        %v1188 = vpop.f32.mrf.mxu0
        %v1189 = vadd.f32 %v1069, %v1188
        %v1190 = vpop.f32.mrf.mxu0
        %v1191 = vadd.f32 %v1065, %v1190
        %v1192 = vpop.f32.mrf.mxu0
        %v1193 = vadd.f32 %v1069, %v1192
        %1194 = vdwg.mxu0
        %v1195 = vunpack.c.l.bf16 %v502
        %v1196 = vunpack.c.l.bf16 %v503
        %v1197 = vadd.f32 %v1187, %v1195
        %v1198 = vadd.f32 %v1191, %v1196
        %v1199 = vpack.c.bf16 %v1198, %v1197
        %v1201 = vunpack.c.l.b16 %v1199
        %v1202 = vunpack.c.h.b16 %v1199
        %v1203 = vpack.c.b16 %v1201, %v1201
        %v1204 = vpack.c.b16 %v1202, %v1202
        %1207 = vst [vmem:[%s479] sm:$0xf] %v1203
        %1208 = vst [vmem:[%s479 + $0x4] sm:$0xf] %v1204
        %v1209 = vpack.c.bf16 %v1193, %v1189
        %v1211 = vunpack.c.l.b16 %v1209
        %v1212 = vunpack.c.h.b16 %v1209
        %v1213 = vpack.c.b16 %v1211, %v1211
        %v1214 = vpack.c.b16 %v1212, %v1212
        %1217 = vst [vmem:[%s486] sm:$0xf] %v1213
        %1218 = vst [vmem:[%s486 + $0x4] sm:$0xf] %v1214
        %s1219 = sand.u32 %s235, 1
        %s1220 = scalar_lea.sflag [#allocation4], %s1219
        %s1221 = sand.u32 %s235, 1
        %s1222 = smul.addr %s1221, 8
        %s1223 = scalar_lea.vmem [#allocation11], %s1222
        %s1224 = sand.u32 %s263, 1
        %s1225 = scalar_lea.sflag [#allocation13], %s1224
        %s1226 = sand.u32 %s263, 1
        %s1227 = smul.addr %s1226, 8
        %s1228 = scalar_lea.vmem [#allocation12], %s1227
        // Predicated region
        $region69: #{tpu_custom_call.1} parent=47 // pred_check
          %p1229 = pneg %p245
        $region70: #{tpu_custom_call.1} parent=47 // pred_check_branch
          %1231 = sbr.rel (%p1229) target = $region72
        $region71: #{tpu_custom_call.1} parent=47 // pred_region
          %s1232 = smul.u32 2, %s38
          %s1234 = ssub.s32 128, 128
          %1235 = vsyncadd %s1220, %s1234
          %s1236 = smul.addr %s37, 6
          %s1237 = sadd.s32 %s1232, %s1236
          %s1238 = smul.addr %s1237, 64
          %s1239 = scalar_lea.hbm %s7, %s1238
          %s1240 = sshll.u32 %s1223, 4
          %s1241 = int_to_ptr.vmem [resolvable:$true] %s1240
          %1246 = dma.vmem_to_hbm [thread:$0]  %s1241, 128, %s1239, %s1220, 64, 64, 4
        $region72: #{tpu_custom_call.1} parent=47 // pred_fallthru
          _
        // Predicated region
        $region73: #{tpu_custom_call.1} parent=47 // pred_check
          %p1247 = pneg %p273
        $region74: #{tpu_custom_call.1} parent=47 // pred_check_branch
          %1249 = sbr.rel (%p1247) target = $region76
        $region75: #{tpu_custom_call.1} parent=47 // pred_region
          %s1250 = smul.u32 2, %s38
          %s1252 = ssub.s32 128, 128
          %1253 = vsyncadd %s1225, %s1252
          %s1254 = smul.addr %s37, 6
          %s1255 = sadd.s32 %s1250, %s1254
          %s1256 = smul.addr %s1255, 64
          %s1257 = scalar_lea.hbm %s8, %s1256
          %s1258 = sshll.u32 %s1228, 4
          %s1259 = int_to_ptr.vmem [resolvable:$true] %s1258
          %1264 = dma.vmem_to_hbm [thread:$0]  %s1259, 128, %s1257, %s1225, 64, 64, 4
        $region76: #{tpu_custom_call.1} parent=47 // pred_fallthru
          _
      $region48: #{tpu_custom_call.1} parent=5 // pred_fallthru
        _
      %p1265 = scmp.le.s32.totalorder 2, %s28
      // Predicated region
      $region77: #{tpu_custom_call.1} parent=5 // pred_check
        %p1266 = pneg %p1265
      $region78: #{tpu_custom_call.1} parent=5 // pred_check_branch
        %1268 = sbr.rel (%p1266) target = $region80
      $region79: #{tpu_custom_call.1} parent=5 // pred_region
        %s1269 = ssub.s32 %s28, 2
        // Predicated region
        $region81: #{tpu_custom_call.1} parent=79 // pred_check
          %p1270 = pneg %p251
        $region82: #{tpu_custom_call.1} parent=79 // pred_check_branch
          %1272 = sbr.rel (%p1270) target = $region84
        $region83: #{tpu_custom_call.1} parent=79 // pred_region
          %s1273 = sand.u32 %s236, 1
          %s1274 = scalar_lea.sflag [#allocation4], %s1273
          %s1275 = sand.u32 %s236, 1
          %s1276 = smul.addr %s1275, 8
          %s1277 = scalar_lea.vmem [#allocation11], %s1276
          %1278 = dma.done %s1274, 128
        $region84: #{tpu_custom_call.1} parent=79 // pred_fallthru
          _
        // Predicated region
        $region85: #{tpu_custom_call.1} parent=79 // pred_check
          %p1279 = pneg %p279
        $region86: #{tpu_custom_call.1} parent=79 // pred_check_branch
          %1281 = sbr.rel (%p1279) target = $region88
        $region87: #{tpu_custom_call.1} parent=79 // pred_region
          %s1282 = sand.u32 %s264, 1
          %s1283 = scalar_lea.sflag [#allocation13], %s1282
          %s1284 = sand.u32 %s264, 1
          %s1285 = smul.addr %s1284, 8
          %s1286 = scalar_lea.vmem [#allocation12], %s1285
          %1287 = dma.done %s1283, 128
        $region88: #{tpu_custom_call.1} parent=79 // pred_fallthru
          _
      $region80: #{tpu_custom_call.1} parent=5 // pred_fallthru
        _
    $region6: #{tpu_custom_call.1} parent=1 // loop_footer
      %s32 = sadd.s32 1, %s28
    $region7: #{tpu_custom_call.1} parent=1 // loop_footer_branch
      %27 = sbr.rel target = $region3
    $region8: #{tpu_custom_call.1} parent=1 // loop_exit
      _
    %1288 = vsyncpa [#allocation3], 1
    %s1289 = scalar_lea.sflag [#allocation3], 1
    %1290 = vsyncpa %s1289, 1
    %1291 = vsyncpa [#allocation6], 1
    %s1292 = scalar_lea.sflag [#allocation6], 1
    %1293 = vsyncpa %s1292, 1
    %1294 = vsyncpa [#allocation9], 1
    %1295 = vsyncpa [#allocation4], 1
    %s1296 = scalar_lea.sflag [#allocation4], 1
    %1297 = vsyncpa %s1296, 1
    %1298 = vsyncpa [#allocation13], 1
    %s1299 = scalar_lea.sflag [#allocation13], 1
    %1300 = vsyncpa %s1299, 1

</llo_original>
